<compile_context>
chip_gen: v7x
topology: tpu7x:2x2x1
jax: 0.10.0
libtpu: 0.0.40
codegen_flags: <defaults>
</compile_context>

<pallas_src>
import math

import jax
import jax.numpy as jnp
from jax.experimental import pallas as pl
from jax.experimental.pallas import tpu as pltpu

_LOG2 = math.log(2.0)

_LANE = 128
_SUBLANE = 8
# ~4 MiB per buffer: 1M f32 elems / 2M bf16 elems per block.
_TARGET_BLOCK_BYTES = 4 * 1024 * 1024
# Explicit scoped-VMEM limit: covers 4 x 4 MiB double-buffered footprint with
# headroom; valid on v5e/v6e (128 MiB physical) and v7x (64 MiB physical).
_VMEM_LIMIT_BYTES = 32 * 1024 * 1024
# Keep at least this many grid steps (when the tensor is big enough) so the
# pipeline overlaps DMA/compute and v7x's two TensorCores both get work.
_MIN_GRID_STEPS = 4


def _cdiv(a, b):
    return (a + b - 1) // b


def _round_up(a, b):
    return _cdiv(a, b) * b


def _shifted_softplus_kernel(x_ref, o_ref):
    # Up-cast to f32 for the transcendentals; write back in the I/O dtype.
    x = x_ref[...].astype(jnp.float32)
    # Numerically stable softplus: softplus(x) = max(x, 0) + log1p(exp(-|x|))
    sp = jnp.maximum(x, 0.0) + jnp.log1p(jnp.exp(-jnp.abs(x)))
    o_ref[...] = (sp - _LOG2).astype(o_ref.dtype)


def _shifted_softplus_2d(x2d):
    """Run the kernel on a lane-dense (rows, width) view; width % 128 == 0."""
    rows, width = x2d.shape
    dtype = x2d.dtype
    itemsize = jnp.dtype(dtype).itemsize

    # Rows per block: target ~_TARGET_BLOCK_BYTES per buffer.
    block_elems = max(_LANE, _TARGET_BLOCK_BYTES // itemsize)
    block_rows = max(_SUBLANE, (block_elems // width) // _SUBLANE * _SUBLANE)

    # Don't let the grid collapse to a single step for mid/large tensors.
    if rows > _SUBLANE:
        cap = max(_SUBLANE, _round_up(_cdiv(rows, _MIN_GRID_STEPS), _SUBLANE))
        block_rows = min(block_rows, cap)
    # Tiny tensors: full row extent (always a legal block shape).
    block_rows = min(block_rows, rows)

    grid = (_cdiv(rows, block_rows),)

    n = rows * width
    cost = pl.CostEstimate(
        flops=4 * n,
        transcendentals=2 * n,
        bytes_accessed=2 * n * itemsize,
    )

    return pl.pallas_call(
        _shifted_softplus_kernel,
        out_shape=jax.ShapeDtypeStruct((rows, width), dtype),
        grid_spec=pltpu.PrefetchScalarGridSpec(
            num_scalar_prefetch=0,
            grid=grid,
            in_specs=[pl.BlockSpec((block_rows, width), lambda i: (i, 0))],
            out_specs=pl.BlockSpec((block_rows, width), lambda i: (i, 0)),
        ),
        compiler_params=pltpu.CompilerParams(
            dimension_semantics=("parallel",),
            vmem_limit_bytes=_VMEM_LIMIT_BYTES,
        ),
        cost_estimate=cost,
    )(x2d)


def shifted_softplus(x):
    orig_shape = x.shape
    dtype = x.dtype

    flat = x.reshape(-1)  # contiguous reshape: free in XLA
    n = flat.shape[0]
    if n == 0:
        return x

    # Widest lane-dense row width that divides n exactly -> zero-copy 2D view.
    width = None
    for w in (4096, 2048, 1024, 512, 256, _LANE):
        if n % w == 0:
            width = w
            break

    if width is not None:
        out2d = _shifted_softplus_2d(flat.reshape(n // width, width))
        return out2d.reshape(orig_shape)

    # Rare ragged case (n not a multiple of 128): kernel on the 128-aligned
    # body, plain JAX on the <128-element tail. No full-tensor pad/slice.
    n_body = (n // _LANE) * _LANE
    parts = []
    if n_body > 0:
        body = _shifted_softplus_2d(
            flat[:n_body].reshape(n_body // _LANE, _LANE)
        ).reshape(-1)
        parts.append(body)
    tail = flat[n_body:]
    tail_out = (
        jax.nn.softplus(tail.astype(jnp.float32)) - _LOG2
    ).astype(dtype)
    parts.append(tail_out)
    out = jnp.concatenate(parts) if len(parts) > 1 else parts[0]
    return out.reshape(orig_shape)


if __name__ == "__main__":
    key = jax.random.PRNGKey(0)

    # Shape consistent with a conv-style NCHW activation tensor.
    x = jax.random.normal(key, (2, 4, 16, 16), dtype=jnp.float32) * 3.0
    y = shifted_softplus(x)
    jax.block_until_ready(y)

    ref = jax.nn.softplus(x) - _LOG2
    assert y.shape == x.shape and y.dtype == x.dtype
    assert jnp.max(jnp.abs(y - ref)) < 1e-5

    # Quick sanity check of the ragged path (n = 1000, not a multiple of 128).
    xr = jax.random.normal(jax.random.PRNGKey(1), (1000,), dtype=jnp.float32) * 3.0
    yr = shifted_softplus(xr)
    jax.block_until_ready(yr)
    refr = jax.nn.softplus(xr) - _LOG2
    assert jnp.max(jnp.abs(yr - refr)) < 1e-5

    print("KERNEL_OK")
</pallas_src>

<mosaic_0001>
module attributes {stable_mosaic.version = 11 : i64} {
  func.func @_shifted_softplus_kernel(%arg0: i32, %arg1: memref<1x2048xf32, #tpu.memory_space<vmem>>, %arg2: memref<1x2048xf32, #tpu.memory_space<vmem>>) attributes {dimension_semantics = [#tpu.dimension_semantics<parallel>], iteration_bounds = array<i64: 1>, scalar_prefetch = 0 : i64, scratch_operands = 0 : i64, tpu.core_type = #tpu.core_type<tc>, window_params = [{transform_indices = @transform_0, window_bounds = array<i64: 1, 2048>}, {transform_indices = @transform_1, window_bounds = array<i64: 1, 2048>}]} {
    %c0 = arith.constant 0 : index
    %c0_0 = arith.constant 0 : index
    %0 = vector.load %arg1[%c0, %c0_0] : memref<1x2048xf32, #tpu.memory_space<vmem>>, vector<1x2048xf32>
    %cst = arith.constant 0.000000e+00 : f32
    %1 = vector.broadcast %cst : f32 to vector<1x2048xf32>
    %2 = arith.maximumf %0, %1 : vector<1x2048xf32>
    %3 = math.absf %0 : vector<1x2048xf32>
    %cst_1 = arith.constant 0.000000e+00 : f32
    %4 = vector.broadcast %cst_1 : f32 to vector<1x2048xf32>
    %5 = arith.subf %4, %3 : vector<1x2048xf32>
    %6 = math.exp %5 : vector<1x2048xf32>
    %7 = math.log1p %6 : vector<1x2048xf32>
    %8 = arith.addf %2, %7 : vector<1x2048xf32>
    %cst_2 = arith.constant 0.693147182 : f32
    %9 = vector.broadcast %cst_2 : f32 to vector<1x2048xf32>
    %10 = arith.subf %8, %9 : vector<1x2048xf32>
    %c0_3 = arith.constant 0 : index
    %c0_4 = arith.constant 0 : index
    %11 = vector.load %arg2[%c0_3, %c0_4] : memref<1x2048xf32, #tpu.memory_space<vmem>>, vector<1x2048xf32>
    tpu.vector_store %arg2[%c0_3, %c0_4], %10 {strides = array<i32>} : memref<1x2048xf32, #tpu.memory_space<vmem>>, vector<1x2048xf32>,
    return
  }
  func.func @transform_0(%arg0: i32) -> (i32, i32) {
    %c0_i32 = arith.constant 0 : i32
    %c0_i32_0 = arith.constant 0 : i32
    return %arg0, %c0_i32 : i32, i32
  }
  func.func @transform_1(%arg0: i32) -> (i32, i32) {
    %c0_i32 = arith.constant 0 : i32
    %c0_i32_0 = arith.constant 0 : i32
    return %arg0, %c0_i32 : i32, i32
  }
}

</mosaic_0001>

<llo_original>
// kernel: tpu_custom_call.1
$region0: #{tpu_custom_call.1}
  #allocation0 [shape = 'u32[]', space=smem, size = 0x4, offset = 0x4, fixed_abs, tag = 'smem constant byte address 0x4 - core index']
  #allocation1 [shape = 'u32[144,128]{1,0:T(1,128)}', space=vmem, size = 0x12000, scoped, tag = 'internal scratch']
  %s0 = inlined_call_operand.hbm [shape: f32[1,2048], index: 0, kind: input, shape index: {}]
  %s1 = inlined_call_operand.hbm [shape: f32[1,2048], index: 1, kind: output, shape index: {}]
  %s2 = sld [smem:[#allocation0]]
  $region18: #{tpu_custom_call.1} parent=0
    _
  %s4 = ssub.s32 1, %s2
  %s5 = scalar_select 0, %s4, %s2
  $region1: #{tpu_custom_call.1} parent=0
    #allocation2 [shape = 'u8[8192]{0}', space=vmem, size = 0x2000, scoped, tag = 'input window, operand 0, single buffered']
    #allocation3 [shape = 's32[1]{0}', space=sflag, size = 0x4, scoped, tag = 'scoped memory for tpu_custom_call.1']
    #allocation4 [shape = 's32[1]{0}', space=sflag, size = 0x4, scoped, tag = 'scoped memory for tpu_custom_call.1']
    #allocation5 [shape = 'u8[8192]{0}', space=vmem, size = 0x2000, scoped, tag = 'output window, operand 0, single buffered']
    %6 = vsyncpa [#allocation3], 0
    %7 = vsyncpa [#allocation4], 0
    // Predicated region
    $region2: #{tpu_custom_call.1} parent=1 // pred_check
      _
    $region3: #{tpu_custom_call.1} parent=1 // pred_check_branch
      %9 = sbr.rel (0) target = $region5
    $region4: #{tpu_custom_call.1} parent=1 // pred_region
      %s11 = ssub.s32 256, 256
      %12 = vsyncadd [#allocation3], %s11
      %s14 = sshll.u32 [#allocation2], 4
      %s15 = int_to_ptr.vmem [resolvable:$true] %s14
      %17 = dma.hbm_to_vmem [thread:$0]  %s0, 256, %s15, [#allocation3]
    $region5: #{tpu_custom_call.1} parent=1 // pred_fallthru
      _
    // Predicated region
    $region6: #{tpu_custom_call.1} parent=1 // pred_check
      _
    $region7: #{tpu_custom_call.1} parent=1 // pred_check_branch
      %19 = sbr.rel (0) target = $region9
    $region8: #{tpu_custom_call.1} parent=1 // pred_region
      %20 = dma.done [#allocation3], 256
    $region9: #{tpu_custom_call.1} parent=1 // pred_fallthru
      _
    %v21 = vld [vmem:[#allocation2] sm:$0xff]
    %v22 = vld [vmem:[#allocation2 + $0x8] sm:$0xff]
    %v23 = vmax.f32 %v21, 0.0
    %v24 = vmax.f32 %v22, 0.0
    %v25 = vand.u32 2147483647, %v21
    %v26 = vand.u32 2147483647, %v22
    %v27 = vsub.f32 0.0, %v25
    %v28 = vsub.f32 0.0, %v26
    %v29 = vmul.f32 %v27, 1.442695
    %v30 = vpow.pop %v29
    %v31 = vmul.f32 %v28, 1.442695
    %v32 = vpow.pop %v31
    %v33 = vadd.f32 %v30, 1.0
    %v34 = vlog2.pop %v33
    %v35 = vmul.f32 %v34, 0.6931472
    %v36 = vmul.f32 -0.5, %v30
    %v37 = vadd.f32 %v36, 1.0
    %v38 = vmul.f32 %v37, %v30
    %v39 = vand.u32 2147483647, %v30
    %vm40 = vcmp.lt.f32.partialorder %v39, 0.0004427343
    %v41 = vsel %vm40, %v38, %v35
    %v42 = vadd.f32 %v32, 1.0
    %v43 = vlog2.pop %v42
    %v44 = vmul.f32 %v43, 0.6931472
    %v45 = vmul.f32 -0.5, %v32
    %v46 = vadd.f32 %v45, 1.0
    %v47 = vmul.f32 %v46, %v32
    %v48 = vand.u32 2147483647, %v32
    %vm49 = vcmp.lt.f32.partialorder %v48, 0.0004427343
    %v50 = vsel %vm49, %v47, %v44
    %v51 = vadd.f32 %v23, %v41
    %v52 = vadd.f32 %v24, %v50
    %v53 = vsub.f32 %v51, 0.6931472
    %v54 = vsub.f32 %v52, 0.6931472
    %55 = vst [vmem:[#allocation5] sm:$0xff] %v53
    %56 = vst [vmem:[#allocation5 + $0x8] sm:$0xff] %v54
    // Predicated region
    $region10: #{tpu_custom_call.1} parent=1 // pred_check
      _
    $region11: #{tpu_custom_call.1} parent=1 // pred_check_branch
      %58 = sbr.rel (0) target = $region13
    $region12: #{tpu_custom_call.1} parent=1 // pred_region
      %s60 = ssub.s32 256, 256
      %61 = vsyncadd [#allocation4], %s60
      %s63 = sshll.u32 [#allocation5], 4
      %s64 = int_to_ptr.vmem [resolvable:$true] %s63
      %66 = dma.vmem_to_hbm [thread:$0]  %s64, 256, %s1, [#allocation4]
    $region13: #{tpu_custom_call.1} parent=1 // pred_fallthru
      _
    // Predicated region
    $region14: #{tpu_custom_call.1} parent=1 // pred_check
      _
    $region15: #{tpu_custom_call.1} parent=1 // pred_check_branch
      %68 = sbr.rel (0) target = $region17
    $region16: #{tpu_custom_call.1} parent=1 // pred_region
      %69 = dma.done [#allocation4], 256
    $region17: #{tpu_custom_call.1} parent=1 // pred_fallthru
      _
    %70 = vsyncpa [#allocation3], 1
    %71 = vsyncpa [#allocation4], 1

</llo_original>
